<compile_context>
chip_gen: v7x
topology: tpu7x:2x2x1
jax: 0.10.0
libtpu: 0.0.40
codegen_flags: <defaults>
</compile_context>

<pallas_src>
import functools

import jax
import jax.numpy as jnp
from jax.experimental import pallas as pl
from jax.experimental.pallas import tpu as pltpu

_LANE = 128
_TOTAL_BUDGET = 8 * 1024 * 1024    # target resident VMEM working set
_INPUT_BUDGET = 2 * 1024 * 1024    # per-input-block budget when L itself is tiled


def _round_up(a, b):
    return (a + b - 1) // b * b


def _sublane(itemsize):
    # Native second-minor tiling: 8 for 4-byte, 16 for 2-byte, 32 for 1-byte dtypes.
    return max(8, 32 // itemsize)


def _vmem_cap_bytes():
    try:
        return int(pltpu.get_tpu_info().vmem_capacity_bytes)
    except Exception:  # conservative fallback (v7x per-core capacity)
        return 64 * 1024 * 1024


def _select_tiles(rows, length, itemsize):
    """Pick (row_tile, l_tile) honoring the (sublane, 128) rule and VMEM budget."""
    sub = _sublane(itemsize)
    # Per-row VMEM bytes for full-L blocks: double-buffered input, two
    # double-buffered (row_tile, 1) outputs and two f32 scratch accumulators,
    # all of which lane-pad to 128 lanes in VMEM.
    fixed_per_row = 2 * 2 * _LANE * itemsize + 2 * _LANE * 4
    full_l_per_row = 2 * length * itemsize + fixed_per_row

    if sub * full_l_per_row <= _TOTAL_BUDGET:
        # Full L per block; grow the row tile up to the working-set budget.
        l_tile = length
        row_tile = (_TOTAL_BUDGET // full_l_per_row) // sub * sub
        row_tile = max(sub, min(row_tile, _round_up(rows, sub)))
        if rows >= 2 * sub:
            # Keep >= 2 row tiles so the "parallel" row axis can be sharded
            # across v7x's two TensorCores.
            row_tile = min(row_tile, _round_up(-(-rows // 2), sub))
    else:
        # L must be tiled (reduction axis); keep the minimal row tile.
        row_tile = sub
        l_tile = max(_LANE, (_INPUT_BUDGET // (row_tile * itemsize)) // _LANE * _LANE)
        l_tile = min(l_tile, _round_up(length, _LANE))
        # TODO(synk): v7x-only: for tiny N*C and huge L, split the L reduction
        # across the two TensorCores (leading size-2 parallel axis producing
        # partial max/sum outputs, combined in the wrapper).
    return row_tile, l_tile


def _concat_pool_kernel(x_ref, mx_ref, av_ref, m_acc, s_acc, *,
                        true_l, l_tile, inv_l, mask_l):
    k = pl.program_id(1)
    last = pl.num_programs(1) - 1

    @pl.when(k == 0)
    def _():
        m_acc[...] = jnp.full_like(m_acc, -jnp.inf)
        s_acc[...] = jnp.zeros_like(s_acc)

    x = x_ref[...]                                   # (row_tile, l_tile), input dtype

    def accumulate(x_for_max, x_for_sum):
        # Max in the input dtype; only the reduced column is cast to f32.
        tile_max = jnp.max(x_for_max, axis=-1, keepdims=True).astype(jnp.float32)
        m_acc[...] = jnp.maximum(m_acc[...], tile_max)
        # Sum accumulates in f32 regardless of the input dtype.
        s_acc[...] = s_acc[...] + jnp.sum(x_for_sum, axis=-1, keepdims=True,
                                          dtype=jnp.float32)

    if mask_l:
        # L % l_tile != 0: the garbage tail of the FINAL L tile must be masked
        # for both max and sum.  All other tiles take the unmasked fast path.
        @pl.when(k != last)
        def _():
            accumulate(x, x)

        @pl.when(k == last)
        def _():
            lane = jax.lax.broadcasted_iota(jnp.int32, x.shape, 1) + k * l_tile
            valid = lane < true_l
            accumulate(jnp.where(valid, x, -jnp.inf), jnp.where(valid, x, 0))
    else:
        accumulate(x, x)

    @pl.when(k == last)
    def _():
        mx_ref[...] = m_acc[...].astype(mx_ref.dtype)
        av_ref[...] = (s_acc[...] * inv_l).astype(av_ref.dtype)


def adaptive_concat_pool1d(x):
    """x: (N, C, L) -> (N, 2*C, 1); channels [0:C) = max pool, [C:2C) = avg pool."""
    assert x.ndim == 3, x.shape
    assert jnp.issubdtype(x.dtype, jnp.floating), "floating-point input expected"
    n, c, length = x.shape
    rows = n * c
    itemsize = jnp.dtype(x.dtype).itemsize

    row_tile, l_tile = _select_tiles(rows, length, itemsize)
    grid = (pl.cdiv(rows, row_tile), pl.cdiv(length, l_tile))

    xf = x.reshape(rows, length)     # free reshape; no padding copy in HBM

    kernel = functools.partial(
        _concat_pool_kernel,
        true_l=length,
        l_tile=l_tile,
        inv_l=float(1.0 / length),   # Python float -> literal (no captured constant)
        mask_l=(length % l_tile != 0),
    )

    mx, av = pl.pallas_call(
        kernel,
        out_shape=(jax.ShapeDtypeStruct((rows, 1), x.dtype),
                   jax.ShapeDtypeStruct((rows, 1), x.dtype)),
        grid_spec=pltpu.PrefetchScalarGridSpec(
            num_scalar_prefetch=0,
            grid=grid,
            # TODO(synk): sweep pipeline_mode=pl.Buffered(3) on the input spec
            # for the L-tiled case; default double-buffering kept for safety.
            in_specs=[pl.BlockSpec((row_tile, l_tile), lambda i, k: (i, k))],
            out_specs=[pl.BlockSpec((row_tile, 1), lambda i, k: (i, 0)),
                       pl.BlockSpec((row_tile, 1), lambda i, k: (i, 0))],
            scratch_shapes=[pltpu.VMEM((row_tile, 1), jnp.float32),
                            pltpu.VMEM((row_tile, 1), jnp.float32)],
        ),
        compiler_params=pltpu.CompilerParams(
            dimension_semantics=("parallel", "arbitrary"),
            vmem_limit_bytes=int(min(_vmem_cap_bytes() // 2, 32 * 1024 * 1024)),
        ),
        cost_estimate=pl.CostEstimate(
            flops=2 * rows * length,
            transcendentals=0,
            bytes_accessed=rows * length * itemsize + 2 * rows * itemsize,
        ),
    )(xf)

    mx = mx.reshape(n, c, 1)
    av = av.reshape(n, c, 1)
    return jnp.concatenate([mx, av], axis=1)   # max channels first, then avg


def _reference(x):
    mx = jnp.max(x, axis=-1, keepdims=True)
    av = jnp.mean(x, axis=-1, keepdims=True)
    return jnp.concatenate([mx, av], axis=1)


if __name__ == "__main__":
    key = jax.random.PRNGKey(0)

    # Small canonical case (NCL input, as the module expects).
    N, C, L = 2, 4, 16
    x = jax.random.normal(key, (N, C, L), dtype=jnp.float32)
    y = adaptive_concat_pool1d(x)
    jax.block_until_ready(y)
    assert y.shape == (N, 2 * C, 1), y.shape
    assert jnp.allclose(y, _reference(x), atol=1e-5, rtol=1e-5), "mismatch vs reference"

    # Ragged row count: exercises the partial row block (no wrapper padding).
    N2, C2, L2 = 3, 7, 50
    x2 = jax.random.normal(jax.random.PRNGKey(1), (N2, C2, L2), dtype=jnp.float32)
    y2 = adaptive_concat_pool1d(x2)
    jax.block_until_ready(y2)
    assert y2.shape == (N2, 2 * C2, 1), y2.shape
    assert jnp.allclose(y2, _reference(x2), atol=1e-5, rtol=1e-5), "mismatch (ragged rows)"

    # Long-L case: exercises the tiled L reduction (init/accumulate/finalize)
    # and the last-tile-only masking of both max and sum.
    N3, C3, L3 = 2, 4, 150_000
    x3 = jax.random.normal(jax.random.PRNGKey(2), (N3, C3, L3), dtype=jnp.float32)
    y3 = adaptive_concat_pool1d(x3)
    jax.block_until_ready(y3)
    assert y3.shape == (N3, 2 * C3, 1), y3.shape
    assert jnp.allclose(y3, _reference(x3), atol=1e-4, rtol=1e-4), "mismatch (tiled L)"

    print("KERNEL_OK")
</pallas_src>

<mosaic_0001>
module attributes {stable_mosaic.version = 11 : i64} {
  func.func @_concat_pool_kernel(%arg0: i32, %arg1: i32, %arg2: memref<8x16xf32, #tpu.memory_space<vmem>>, %arg3: memref<8x1xf32, #tpu.memory_space<vmem>>, %arg4: memref<8x1xf32, #tpu.memory_space<vmem>>, %arg5: memref<8x1xf32, #tpu.memory_space<vmem>>, %arg6: memref<8x1xf32, #tpu.memory_space<vmem>>) attributes {dimension_semantics = [#tpu.dimension_semantics<parallel>, #tpu.dimension_semantics<arbitrary>], iteration_bounds = array<i64: 1, 1>, scalar_prefetch = 0 : i64, scratch_operands = 2 : i64, tpu.core_type = #tpu.core_type<tc>, window_params = [{transform_indices = @transform_0, window_bounds = array<i64: 8, 16>}, {transform_indices = @transform_1, window_bounds = array<i64: 8, 1>}, {transform_indices = @transform_2, window_bounds = array<i64: 8, 1>}]} {
    %c0_i32 = arith.constant 0 : i32
    %0 = arith.cmpi eq, %arg1, %c0_i32 : i32
    %1 = arith.extui %0 : i1 to i32
    %c0_i32_0 = arith.constant 0 : i32
    %2 = arith.cmpi ne, %1, %c0_i32_0 : i32
    scf.if %2 {
      %cst_13 = arith.constant 0xFF800000 : f32
      %17 = vector.broadcast %cst_13 : f32 to vector<8x1xf32>
      %c0_14 = arith.constant 0 : index
      %c0_15 = arith.constant 0 : index
      %18 = vector.load %arg5[%c0_14, %c0_15] : memref<8x1xf32, #tpu.memory_space<vmem>>, vector<8x1xf32>
      tpu.vector_store %arg5[%c0_14, %c0_15], %17 {strides = array<i32>} : memref<8x1xf32, #tpu.memory_space<vmem>>, vector<8x1xf32>,
      %cst_16 = arith.constant 0.000000e+00 : f32
      %19 = vector.broadcast %cst_16 : f32 to vector<8x1xf32>
      %c0_17 = arith.constant 0 : index
      %c0_18 = arith.constant 0 : index
      %20 = vector.load %arg6[%c0_17, %c0_18] : memref<8x1xf32, #tpu.memory_space<vmem>>, vector<8x1xf32>
      tpu.vector_store %arg6[%c0_17, %c0_18], %19 {strides = array<i32>} : memref<8x1xf32, #tpu.memory_space<vmem>>, vector<8x1xf32>,
    } else {
    }
    %c0 = arith.constant 0 : index
    %c0_1 = arith.constant 0 : index
    %3 = vector.load %arg2[%c0, %c0_1] : memref<8x16xf32, #tpu.memory_space<vmem>>, vector<8x16xf32>
    %cst = arith.constant dense<0xFF800000> : vector<8xf32>
    %4 = vector.multi_reduction <maximumf>, %3, %cst [1] : vector<8x16xf32> to vector<8xf32>
    %5 = vector.shape_cast %4 : vector<8xf32> to vector<8x1xf32>
    %c0_2 = arith.constant 0 : index
    %c0_3 = arith.constant 0 : index
    %6 = vector.load %arg5[%c0_2, %c0_3] : memref<8x1xf32, #tpu.memory_space<vmem>>, vector<8x1xf32>
    %7 = arith.maximumf %6, %5 : vector<8x1xf32>
    %c0_4 = arith.constant 0 : index
    %c0_5 = arith.constant 0 : index
    %8 = vector.load %arg5[%c0_4, %c0_5] : memref<8x1xf32, #tpu.memory_space<vmem>>, vector<8x1xf32>
    tpu.vector_store %arg5[%c0_4, %c0_5], %7 {strides = array<i32>} : memref<8x1xf32, #tpu.memory_space<vmem>>, vector<8x1xf32>,
    %c0_6 = arith.constant 0 : index
    %c0_7 = arith.constant 0 : index
    %9 = vector.load %arg6[%c0_6, %c0_7] : memref<8x1xf32, #tpu.memory_space<vmem>>, vector<8x1xf32>
    %cst_8 = arith.constant dense<0.000000e+00> : vector<8xf32>
    %10 = vector.multi_reduction <add>, %3, %cst_8 [1] : vector<8x16xf32> to vector<8xf32>
    %11 = vector.shape_cast %10 : vector<8xf32> to vector<8x1xf32>
    %12 = arith.addf %9, %11 : vector<8x1xf32>
    %c0_9 = arith.constant 0 : index
    %c0_10 = arith.constant 0 : index
    %13 = vector.load %arg6[%c0_9, %c0_10] : memref<8x1xf32, #tpu.memory_space<vmem>>, vector<8x1xf32>
    tpu.vector_store %arg6[%c0_9, %c0_10], %12 {strides = array<i32>} : memref<8x1xf32, #tpu.memory_space<vmem>>, vector<8x1xf32>,
    %c0_i32_11 = arith.constant 0 : i32
    %14 = arith.cmpi eq, %arg1, %c0_i32_11 : i32
    %15 = arith.extui %14 : i1 to i32
    %c0_i32_12 = arith.constant 0 : i32
    %16 = arith.cmpi ne, %15, %c0_i32_12 : i32
    scf.if %16 {
      %c0_13 = arith.constant 0 : index
      %c0_14 = arith.constant 0 : index
      %17 = vector.load %arg5[%c0_13, %c0_14] : memref<8x1xf32, #tpu.memory_space<vmem>>, vector<8x1xf32>
      %c0_15 = arith.constant 0 : index
      %c0_16 = arith.constant 0 : index
      %18 = vector.load %arg3[%c0_15, %c0_16] : memref<8x1xf32, #tpu.memory_space<vmem>>, vector<8x1xf32>
      tpu.vector_store %arg3[%c0_15, %c0_16], %17 {strides = array<i32>} : memref<8x1xf32, #tpu.memory_space<vmem>>, vector<8x1xf32>,
      %c0_17 = arith.constant 0 : index
      %c0_18 = arith.constant 0 : index
      %19 = vector.load %arg6[%c0_17, %c0_18] : memref<8x1xf32, #tpu.memory_space<vmem>>, vector<8x1xf32>
      %cst_19 = arith.constant 6.250000e-02 : f32
      %20 = vector.broadcast %cst_19 : f32 to vector<8x1xf32>
      %21 = arith.mulf %19, %20 : vector<8x1xf32>
      %c0_20 = arith.constant 0 : index
      %c0_21 = arith.constant 0 : index
      %22 = vector.load %arg4[%c0_20, %c0_21] : memref<8x1xf32, #tpu.memory_space<vmem>>, vector<8x1xf32>
      tpu.vector_store %arg4[%c0_20, %c0_21], %21 {strides = array<i32>} : memref<8x1xf32, #tpu.memory_space<vmem>>, vector<8x1xf32>,
    } else {
    }
    return
  }
  func.func @transform_0(%arg0: i32, %arg1: i32) -> (i32, i32) {
    %c0_i32 = arith.constant 0 : i32
    return %arg0, %arg1 : i32, i32
  }
  func.func @transform_1(%arg0: i32, %arg1: i32) -> (i32, i32) {
    %c0_i32 = arith.constant 0 : i32
    %c0_i32_0 = arith.constant 0 : i32
    return %arg0, %c0_i32 : i32, i32
  }
  func.func @transform_2(%arg0: i32, %arg1: i32) -> (i32, i32) {
    %c0_i32 = arith.constant 0 : i32
    %c0_i32_0 = arith.constant 0 : i32
    return %arg0, %c0_i32 : i32, i32
  }
}

</mosaic_0001>

<llo_original>
// kernel: tpu_custom_call.1
$region0: #{tpu_custom_call.1}
  #allocation0 [shape = 'u32[]', space=smem, size = 0x4, offset = 0x4, fixed_abs, tag = 'smem constant byte address 0x4 - core index']
  #allocation1 [shape = 'u32[144,128]{1,0:T(1,128)}', space=vmem, size = 0x12000, scoped, tag = 'internal scratch']
  #allocation2 [shape = 'f32[8,1]{1,0:T(8,128)}', space=vmem, size = 0x1000, scoped, tag = 'scratch operand']
  #allocation3 [shape = 'f32[8,1]{1,0:T(8,128)}', space=vmem, size = 0x1000, scoped, tag = 'scratch operand']
  %s0 = inlined_call_operand.hbm [shape: f32[8,16], index: 0, kind: input, shape index: {}]
  %s1 = inlined_call_operand.vmem [shape: f32[8,1], index: 1, kind: output, shape index: {0}]
  %s2 = inlined_call_operand.vmem [shape: f32[8,1], index: 2, kind: output, shape index: {1}]
  %3 = xla_tuple %s1, %s2
  %s4 = sld [smem:[#allocation0]]
  $region34: #{tpu_custom_call.1} parent=0
    _
  %s6 = ssub.s32 1, %s4
  %s7 = scalar_select 0, %s6, %s4
  $region1: #{tpu_custom_call.1} parent=0
    #allocation4 [shape = 'u8[4096]{0}', space=vmem, size = 0x1000, scoped, tag = 'input window, operand 0, single buffered']
    #allocation5 [shape = 's32[1]{0}', space=sflag, size = 0x4, scoped, tag = 'scoped memory for tpu_custom_call.1']
    %8 = vsyncpa [#allocation5], 0
    // Predicated region
    $region2: #{tpu_custom_call.1} parent=1 // pred_check
      _
    $region3: #{tpu_custom_call.1} parent=1 // pred_check_branch
      %10 = sbr.rel (0) target = $region5
    $region4: #{tpu_custom_call.1} parent=1 // pred_region
      %s12 = ssub.s32 128, 128
      %13 = vsyncadd [#allocation5], %s12
      %s15 = sshll.u32 [#allocation4], 4
      %s16 = int_to_ptr.vmem [resolvable:$true] %s15
      %18 = dma.hbm_to_vmem [thread:$0]  %s0, 128, %s16, [#allocation5]
    $region5: #{tpu_custom_call.1} parent=1 // pred_fallthru
      _
    // Predicated region
    $region6: #{tpu_custom_call.1} parent=1 // pred_check
      _
    $region7: #{tpu_custom_call.1} parent=1 // pred_check_branch
      %20 = sbr.rel (0) target = $region9
    $region8: #{tpu_custom_call.1} parent=1 // pred_region
      %21 = dma.done [#allocation5], 128
    $region9: #{tpu_custom_call.1} parent=1 // pred_fallthru
      _
    %p22 = scmp.eq.s32.totalorder 0, 0
    // Predicated region
    $region10: #{tpu_custom_call.1} parent=1 // pred_check
      %p23 = pneg %p22
    $region11: #{tpu_custom_call.1} parent=1 // pred_check_branch
      %25 = sbr.rel (%p23) target = $region13
    $region12: #{tpu_custom_call.1} parent=1 // pred_region
      %vm26 = vcmask 7168
      %27 = vst.msk [vmem:[#allocation2] sm:$0xff] %vm26, -inf
      %28 = vst.msk [vmem:[#allocation3] sm:$0xff] %vm26, 0.0
    $region13: #{tpu_custom_call.1} parent=1 // pred_fallthru
      _
    %v29 = vld [vmem:[#allocation4] sm:$0xff]
    %vm30 = vcmask 130048
    %v31 = vsel %vm30, %v29, -inf
    %32 = vmax.xlane.f32.xlu0 %v31
    %v33 = vpop.xlane.xlu0 %32
    %v34 = vld [vmem:[#allocation2] sm:$0xff]
    %v35 = vmax.f32 %v34, %v33
    %vm36 = vcmask 7168
    %37 = vst.msk [vmem:[#allocation2] sm:$0xff] %vm36, %v35
    %v38 = vld [vmem:[#allocation3] sm:$0xff]
    %v39 = vsel %vm30, %v29, 0.0
    %40 = vadd.xlane.f32.xlu0 %v39
    %v41 = vpop.xlane.xlu0 %40
    %v42 = vadd.f32 %v38, %v41
    %43 = vst.msk [vmem:[#allocation3] sm:$0xff] %vm36, %v42
    // Predicated region
    $region14: #{tpu_custom_call.1} parent=1 // pred_check
      %p44 = pneg %p22
    $region15: #{tpu_custom_call.1} parent=1 // pred_check_branch
      %46 = sbr.rel (%p44) target = $region17
    $region16: #{tpu_custom_call.1} parent=1 // pred_region
      %v47 = vld [vmem:[#allocation2] sm:$0xff]
      %48 = vst.msk [vmem:[%s1] sm:$0xff] %vm36, %v47
      %v49 = vld [vmem:[#allocation3] sm:$0xff]
      %v50 = vmul.f32 %v49, 0.0625
      %51 = vst.msk [vmem:[%s2] sm:$0xff] %vm36, %v50
    $region17: #{tpu_custom_call.1} parent=1 // pred_fallthru
      _
    // Predicated region
    $region18: #{tpu_custom_call.1} parent=1 // pred_check
      _
    $region19: #{tpu_custom_call.1} parent=1 // pred_check_branch
      %53 = sbr.rel (0) target = $region21
    $region20: #{tpu_custom_call.1} parent=1 // pred_region
      _
    $region21: #{tpu_custom_call.1} parent=1 // pred_fallthru
      _
    // Predicated region
    $region22: #{tpu_custom_call.1} parent=1 // pred_check
      _
    $region23: #{tpu_custom_call.1} parent=1 // pred_check_branch
      %55 = sbr.rel (0) target = $region25
    $region24: #{tpu_custom_call.1} parent=1 // pred_region
      _
    $region25: #{tpu_custom_call.1} parent=1 // pred_fallthru
      _
    // Predicated region
    $region26: #{tpu_custom_call.1} parent=1 // pred_check
      _
    $region27: #{tpu_custom_call.1} parent=1 // pred_check_branch
      %57 = sbr.rel (0) target = $region29
    $region28: #{tpu_custom_call.1} parent=1 // pred_region
      _
    $region29: #{tpu_custom_call.1} parent=1 // pred_fallthru
      _
    // Predicated region
    $region30: #{tpu_custom_call.1} parent=1 // pred_check
      _
    $region31: #{tpu_custom_call.1} parent=1 // pred_check_branch
      %59 = sbr.rel (0) target = $region33
    $region32: #{tpu_custom_call.1} parent=1 // pred_region
      _
    $region33: #{tpu_custom_call.1} parent=1 // pred_fallthru
      _
    %60 = vsyncpa [#allocation5], 1

</llo_original>
